<compile_context>
chip_gen: v6e
topology: v6e:2x2x1
jax: 0.10.0
libtpu: 0.0.40
codegen_flags: <defaults>
</compile_context>

<pallas_src>
import jax
import jax.numpy as jnp
from jax.experimental import pallas as pl
from jax.experimental.pallas import tpu as pltpu

LANE = 128                      # lane width; feature dims padded to this
SUB = 16                        # bf16 sublane tile height; batch tiles are multiples
_FALLBACK_VMEM = 32 * 1024 * 1024


def _round_up(x, m):
    return (x + m - 1) // m * m


def _vmem_budget():
    """Generation-aware VMEM budget: ~60% of physical VMEM, 32 MiB fallback."""
    try:
        cap = getattr(pltpu.get_tpu_info(), "vmem_capacity_bytes", None)
    except Exception:
        cap = None
    if not cap:
        return _FALLBACK_VMEM
    return max(16 * 1024 * 1024, int(cap) * 3 // 5)


# ----------------------------- Pallas kernel -------------------------------

def _mlp_kernel(x_ref,
                w1_ref, c1_ref,
                w2_ref, c2_ref,
                w3_ref, c3_ref,
                w4_ref, b4_ref,
                o_ref):
    """Fused MLP: 3x relu(x_bf16 @ W_bf16 + c) (BN folded) + VPU head + sigmoid."""
    # Block 1: Linear + folded BatchNorm(eval) + ReLU (x already bf16 from the stream)
    h = jnp.dot(x_ref[...], w1_ref[...],
                preferred_element_type=jnp.float32) + c1_ref[...]
    h = jnp.maximum(h, 0.0)

    # Block 2
    h = jnp.dot(h.astype(jnp.bfloat16), w2_ref[...],
                preferred_element_type=jnp.float32) + c2_ref[...]
    h = jnp.maximum(h, 0.0)

    # Block 3
    h = jnp.dot(h.astype(jnp.bfloat16), w3_ref[...],
                preferred_element_type=jnp.float32) + c3_ref[...]
    h = jnp.maximum(h, 0.0)

    # Head: Linear(prev, 1) as VPU multiply + lane reduction (not an N=1 matmul),
    # emitted as a lane-dense (1, TB) row (transpose rides the XLU slot).
    logits = jnp.sum(h * w4_ref[...], axis=-1, keepdims=True) + b4_ref[...]   # (TB, 1)
    o_ref[...] = jax.nn.sigmoid(jnp.transpose(logits))                        # (1, TB)


def mlp_forward_pallas(x, kp):
    """x: [B, D_in] -> [B] f32 via the fused, batch-tiled kernel."""
    B, d_in = x.shape
    din_p = kp["w1"].shape[0]
    budget = _vmem_budget()

    # Single cast to bf16 (block-1 LHS was bf16 anyway -> no extra precision loss).
    x = x.astype(jnp.bfloat16)
    # Zero-pad features to the padded input width (padded weight rows are zero).
    if d_in < din_p:
        x = jnp.pad(x, ((0, 0), (0, din_p - d_in)))

    weights = (kp["w1"], kp["c1"], kp["w2"], kp["c2"],
               kp["w3"], kp["c3"], kp["w4"], kp["b4"])
    resident = sum(int(w.size) * w.dtype.itemsize for w in weights)  # single-buffered
    max_hidden_p = max(w.shape[-1] for w in weights)

    # Largest batch tile (cap 2048) such that: resident weights (1 buffer) +
    # double-buffered bf16 x / f32 out streams + live f32 intermediates fit.
    tb = max(SUB, (min(2048, _round_up(B, SUB)) // SUB) * SUB)
    while tb > SUB:
        stream = 2 * (tb * din_p * 2) + 2 * (tb * 4)       # x (bf16) + out (f32), 2 bufs
        act = 4 * tb * max(din_p, max_hidden_p) * 4        # loose bound on live h (f32)
        if resident + stream + act <= budget:
            break
        tb = max(SUB, (tb // 2 // SUB) * SUB)

    # Keep >= 2 grid steps when the batch allows it so dimension_semantics
    # ("parallel",) can shard the batch axis across both TensorCores on v7x.
    b_pad0 = _round_up(B, SUB)
    if b_pad0 >= 2 * SUB and _round_up(B, tb) // tb < 2:
        tb = max(SUB, min(tb, (b_pad0 // 2 // SUB) * SUB))

    b_pad = _round_up(B, tb)
    if b_pad > B:
        x = jnp.pad(x, ((0, b_pad - B), (0, 0)))           # garbage rows sliced off below
    grid_b = b_pad // tb

    const2 = lambda i: (0, 0)                              # weights: fetch once, stay resident
    def resident_spec(w):
        return pl.BlockSpec(w.shape, const2, pipeline_mode=pl.Buffered(1))

    in_specs = [pl.BlockSpec((tb, din_p), lambda i: (i, 0))]   # streamed bf16 tile
    in_specs += [resident_spec(w) for w in weights]
    out_specs = pl.BlockSpec((1, tb), lambda i: (i, 0))        # lane-dense output row

    out = pl.pallas_call(
        _mlp_kernel,
        out_shape=jax.ShapeDtypeStruct((grid_b, tb), jnp.float32),
        grid=(grid_b,),
        in_specs=in_specs,
        out_specs=out_specs,
        compiler_params=pltpu.CompilerParams(
            dimension_semantics=("parallel",),             # megacore on v7x
            vmem_limit_bytes=budget,
        ),
    )(x, *weights)
    return out.reshape(b_pad)[:B]


# --------------------------- Params & JAX glue ------------------------------

def init_raw_params(key, numerical_features, categorical_cardinalities,
                    embedding_dims, hidden_dims):
    """PyTorch-layout parameters (W [out,in], b [out], BN stats)."""
    keys = iter(jax.random.split(key, 64))
    raw = {"embeddings": [], "linears": [], "bns": []}
    for card, dim in zip(categorical_cardinalities, embedding_dims):
        raw["embeddings"].append(
            jax.random.normal(next(keys), (card, dim), jnp.float32) * 0.1)

    input_dim = numerical_features + sum(embedding_dims)
    dims = [input_dim] + list(hidden_dims)
    for i in range(len(hidden_dims)):
        d_in, d_out = dims[i], dims[i + 1]
        W = jax.random.normal(next(keys), (d_out, d_in), jnp.float32) / jnp.sqrt(d_in)
        b = jax.random.normal(next(keys), (d_out,), jnp.float32) * 0.01
        gamma = 1.0 + 0.1 * jax.random.normal(next(keys), (d_out,), jnp.float32)
        beta = 0.05 * jax.random.normal(next(keys), (d_out,), jnp.float32)
        mean = 0.1 * jax.random.normal(next(keys), (d_out,), jnp.float32)
        var = 1.0 + 0.2 * jax.random.uniform(next(keys), (d_out,), jnp.float32)
        raw["linears"].append((W, b))
        raw["bns"].append((gamma, beta, mean, var))

    d_last = dims[-1]
    Wh = jax.random.normal(next(keys), (1, d_last), jnp.float32) / jnp.sqrt(d_last)
    bh = jax.random.normal(next(keys), (1,), jnp.float32) * 0.01
    raw["head"] = (Wh, bh)
    return raw, input_dim


def prepare_kernel_params(raw, input_dim, hidden_dims, eps=1e-5):
    """Fold BN (eval) into the weights, zero-pad feature dims to LANE, cast to bf16."""
    dims = [input_dim] + list(hidden_dims)
    dims_p = [_round_up(d, LANE) for d in dims]
    kp = {}
    for n in range(len(hidden_dims)):
        W, b = raw["linears"][n]                      # [out, in], [out]
        g, bt, m, v = raw["bns"][n]
        scale = g / jnp.sqrt(v + eps)                 # BN eval fold
        Wf = (W * scale[:, None]).T                   # [in, out], column-scaled
        cf = b * scale + (bt - m * scale)             # c' = b*s + t
        Wp = jnp.zeros((dims_p[n], dims_p[n + 1]), jnp.float32)
        Wp = Wp.at[:dims[n], :dims[n + 1]].set(Wf)
        cp = jnp.zeros((1, dims_p[n + 1]), jnp.float32).at[0, :dims[n + 1]].set(cf)
        kp[f"w{n + 1}"] = Wp.astype(jnp.bfloat16)     # bf16 weights, f32 accumulation
        kp[f"c{n + 1}"] = cp
    Wh, bh = raw["head"]                              # [1, d_last], [1]
    w4 = jnp.zeros((1, dims_p[-1]), jnp.float32).at[0, :dims[-1]].set(Wh[0])
    kp["w4"] = w4                                     # f32 row (head is VPU mul + reduce)
    kp["b4"] = bh.reshape(1, 1).astype(jnp.float32)
    return kp


@jax.jit
def embedding_ffnn_forward(kp, embeddings, X_numerical, X_categorical):
    """Embedding lookup + concat (JAX glue) then the fused Pallas MLP."""
    # TODO(synk): embedding gather + concat stay in plain JAX (data-dependent
    # gather over ragged per-column tables has no clean rectangular BlockSpec
    # form); the full MLP hot path runs in the Pallas kernel.
    emb = [jnp.take(tab, X_categorical[:, i], axis=0)
           for i, tab in enumerate(embeddings)]
    x = jnp.concatenate([X_numerical] + emb, axis=1) if emb else X_numerical
    return mlp_forward_pallas(x, kp)                  # (B,), matches output.squeeze()


def reference_forward(raw, X_numerical, X_categorical, eps=1e-5):
    """Pure-JAX f32 reference (unfolded params) for correctness checking."""
    emb = [jnp.take(tab, X_categorical[:, i], axis=0)
           for i, tab in enumerate(raw["embeddings"])]
    x = jnp.concatenate([X_numerical] + emb, axis=1) if emb else X_numerical
    for (W, b), (g, bt, m, v) in zip(raw["linears"], raw["bns"]):
        x = x @ W.T + b
        x = (x - m) / jnp.sqrt(v + eps) * g + bt
        x = jnp.maximum(x, 0.0)
    Wh, bh = raw["head"]
    x = x @ Wh.T + bh
    return jax.nn.sigmoid(x).squeeze(-1)


# --------------------------------- main -------------------------------------

if __name__ == "__main__":
    numerical_features = 6
    categorical_cardinalities = [5, 7, 4]
    embedding_dims = [3, 4, 2]
    hidden_dims = [32, 16, 8]     # small instance of hidden_dims=[256, 128, 64]
    batch = 8

    key = jax.random.PRNGKey(0)
    k_params, k_num, k_cat = jax.random.split(key, 3)

    raw, input_dim = init_raw_params(k_params, numerical_features,
                                     categorical_cardinalities,
                                     embedding_dims, hidden_dims)
    kp = prepare_kernel_params(raw, input_dim, hidden_dims)

    X_numerical = jax.random.normal(k_num, (batch, numerical_features), jnp.float32)
    cat_keys = jax.random.split(k_cat, len(categorical_cardinalities))
    X_categorical = jnp.stack(
        [jax.random.randint(cat_keys[i], (batch,), 0, card)
         for i, card in enumerate(categorical_cardinalities)], axis=1).astype(jnp.int32)

    out = embedding_ffnn_forward(kp, raw["embeddings"], X_numerical, X_categorical)
    out = jax.block_until_ready(out)

    ref = reference_forward(raw, X_numerical, X_categorical)

    assert out.shape == (batch,), out.shape
    assert bool(jnp.all((out >= 0.0) & (out <= 1.0)))
    assert bool(jnp.allclose(out, ref, atol=2e-2)), (out, ref)
    print("KERNEL_OK")
</pallas_src>

<mosaic_0001>
module attributes {stable_mosaic.version = 11 : i64} {
  func.func @_mlp_kernel(%arg0: i32, %arg1: memref<16x128xbf16, #tpu.memory_space<vmem>>, %arg2: memref<128x128xbf16, #tpu.memory_space<vmem>>, %arg3: memref<1x128xf32, #tpu.memory_space<vmem>>, %arg4: memref<128x128xbf16, #tpu.memory_space<vmem>>, %arg5: memref<1x128xf32, #tpu.memory_space<vmem>>, %arg6: memref<128x128xbf16, #tpu.memory_space<vmem>>, %arg7: memref<1x128xf32, #tpu.memory_space<vmem>>, %arg8: memref<1x128xf32, #tpu.memory_space<vmem>>, %arg9: memref<1x1xf32, #tpu.memory_space<vmem>>, %arg10: memref<1x16xf32, #tpu.memory_space<vmem>>) attributes {dimension_semantics = [#tpu.dimension_semantics<parallel>], iteration_bounds = array<i64: 1>, scalar_prefetch = 0 : i64, scratch_operands = 0 : i64, tpu.core_type = #tpu.core_type<tc>, window_params = [{transform_indices = @transform_0, window_bounds = array<i64: 16, 128>}, {pipeline_mode = #tpu.pipeline_mode<synchronous>, transform_indices = @transform_1, window_bounds = array<i64: 128, 128>}, {pipeline_mode = #tpu.pipeline_mode<synchronous>, transform_indices = @transform_2, window_bounds = array<i64: 1, 128>}, {pipeline_mode = #tpu.pipeline_mode<synchronous>, transform_indices = @transform_3, window_bounds = array<i64: 128, 128>}, {pipeline_mode = #tpu.pipeline_mode<synchronous>, transform_indices = @transform_4, window_bounds = array<i64: 1, 128>}, {pipeline_mode = #tpu.pipeline_mode<synchronous>, transform_indices = @transform_5, window_bounds = array<i64: 128, 128>}, {pipeline_mode = #tpu.pipeline_mode<synchronous>, transform_indices = @transform_6, window_bounds = array<i64: 1, 128>}, {pipeline_mode = #tpu.pipeline_mode<synchronous>, transform_indices = @transform_7, window_bounds = array<i64: 1, 128>}, {pipeline_mode = #tpu.pipeline_mode<synchronous>, transform_indices = @transform_8, window_bounds = array<i64: 1, 1>}, {transform_indices = @transform_9, window_bounds = array<i64: 1, 16>}]} {
    %c0 = arith.constant 0 : index
    %c0_0 = arith.constant 0 : index
    %0 = vector.load %arg1[%c0, %c0_0] : memref<16x128xbf16, #tpu.memory_space<vmem>>, vector<16x128xbf16>
    %c0_1 = arith.constant 0 : index
    %c0_2 = arith.constant 0 : index
    %1 = vector.load %arg2[%c0_1, %c0_2] : memref<128x128xbf16, #tpu.memory_space<vmem>>, vector<128x128xbf16>
    %cst = arith.constant dense<0.000000e+00> : vector<16x128xf32>
    %2 = tpu.matmul %0, %1, %cst {dimension_numbers = #tpu.dot_dimension_numbers<[1], [0], [0], [1], [0, 0, 1, 1], [], []>} : vector<16x128xbf16>, vector<128x128xbf16>, vector<16x128xf32> -> vector<16x128xf32>
    %c0_3 = arith.constant 0 : index
    %c0_4 = arith.constant 0 : index
    %3 = vector.load %arg3[%c0_3, %c0_4] : memref<1x128xf32, #tpu.memory_space<vmem>>, vector<1x128xf32>
    %4 = vector.broadcast %3 : vector<1x128xf32> to vector<16x128xf32>
    %5 = arith.addf %2, %4 : vector<16x128xf32>
    %cst_5 = arith.constant 0.000000e+00 : f32
    %6 = vector.broadcast %cst_5 : f32 to vector<16x128xf32>
    %7 = arith.maximumf %5, %6 : vector<16x128xf32>
    %8 = arith.truncf %7 : vector<16x128xf32> to vector<16x128xbf16>
    %c0_6 = arith.constant 0 : index
    %c0_7 = arith.constant 0 : index
    %9 = vector.load %arg4[%c0_6, %c0_7] : memref<128x128xbf16, #tpu.memory_space<vmem>>, vector<128x128xbf16>
    %cst_8 = arith.constant dense<0.000000e+00> : vector<16x128xf32>
    %10 = tpu.matmul %8, %9, %cst_8 {dimension_numbers = #tpu.dot_dimension_numbers<[1], [0], [0], [1], [0, 0, 1, 1], [], []>} : vector<16x128xbf16>, vector<128x128xbf16>, vector<16x128xf32> -> vector<16x128xf32>
    %c0_9 = arith.constant 0 : index
    %c0_10 = arith.constant 0 : index
    %11 = vector.load %arg5[%c0_9, %c0_10] : memref<1x128xf32, #tpu.memory_space<vmem>>, vector<1x128xf32>
    %12 = vector.broadcast %11 : vector<1x128xf32> to vector<16x128xf32>
    %13 = arith.addf %10, %12 : vector<16x128xf32>
    %cst_11 = arith.constant 0.000000e+00 : f32
    %14 = vector.broadcast %cst_11 : f32 to vector<16x128xf32>
    %15 = arith.maximumf %13, %14 : vector<16x128xf32>
    %16 = arith.truncf %15 : vector<16x128xf32> to vector<16x128xbf16>
    %c0_12 = arith.constant 0 : index
    %c0_13 = arith.constant 0 : index
    %17 = vector.load %arg6[%c0_12, %c0_13] : memref<128x128xbf16, #tpu.memory_space<vmem>>, vector<128x128xbf16>
    %cst_14 = arith.constant dense<0.000000e+00> : vector<16x128xf32>
    %18 = tpu.matmul %16, %17, %cst_14 {dimension_numbers = #tpu.dot_dimension_numbers<[1], [0], [0], [1], [0, 0, 1, 1], [], []>} : vector<16x128xbf16>, vector<128x128xbf16>, vector<16x128xf32> -> vector<16x128xf32>
    %c0_15 = arith.constant 0 : index
    %c0_16 = arith.constant 0 : index
    %19 = vector.load %arg7[%c0_15, %c0_16] : memref<1x128xf32, #tpu.memory_space<vmem>>, vector<1x128xf32>
    %20 = vector.broadcast %19 : vector<1x128xf32> to vector<16x128xf32>
    %21 = arith.addf %18, %20 : vector<16x128xf32>
    %cst_17 = arith.constant 0.000000e+00 : f32
    %22 = vector.broadcast %cst_17 : f32 to vector<16x128xf32>
    %23 = arith.maximumf %21, %22 : vector<16x128xf32>
    %c0_18 = arith.constant 0 : index
    %c0_19 = arith.constant 0 : index
    %24 = vector.load %arg8[%c0_18, %c0_19] : memref<1x128xf32, #tpu.memory_space<vmem>>, vector<1x128xf32>
    %25 = vector.broadcast %24 : vector<1x128xf32> to vector<16x128xf32>
    %26 = arith.mulf %23, %25 : vector<16x128xf32>
    %cst_20 = arith.constant dense<0.000000e+00> : vector<16xf32>
    %27 = vector.multi_reduction <add>, %26, %cst_20 [1] : vector<16x128xf32> to vector<16xf32>
    %28 = vector.shape_cast %27 : vector<16xf32> to vector<16x1xf32>
    %c0_21 = arith.constant 0 : index
    %c0_22 = arith.constant 0 : index
    %29 = vector.load %arg9[%c0_21, %c0_22] : memref<1x1xf32, #tpu.memory_space<vmem>>, vector<1x1xf32>
    %30 = vector.broadcast %29 : vector<1x1xf32> to vector<16x1xf32>
    %31 = arith.addf %28, %30 : vector<16x1xf32>
    %32 = tpu.transpose %31, [1, 0] : vector<16x1xf32> -> vector<1x16xf32>
    %33 = arith.negf %32 : vector<1x16xf32>
    %34 = math.exp %33 : vector<1x16xf32>
    %cst_23 = arith.constant 1.000000e+00 : f32
    %35 = vector.broadcast %cst_23 : f32 to vector<1x16xf32>
    %36 = arith.addf %35, %34 : vector<1x16xf32>
    %37 = arith.divf %35, %36 : vector<1x16xf32>
    %c0_24 = arith.constant 0 : index
    %c0_25 = arith.constant 0 : index
    %38 = vector.load %arg10[%c0_24, %c0_25] : memref<1x16xf32, #tpu.memory_space<vmem>>, vector<1x16xf32>
    tpu.vector_store %arg10[%c0_24, %c0_25], %37 {strides = array<i32>} : memref<1x16xf32, #tpu.memory_space<vmem>>, vector<1x16xf32>,
    return
  }
  func.func @transform_0(%arg0: i32) -> (i32, i32) {
    %c0_i32 = arith.constant 0 : i32
    %c0_i32_0 = arith.constant 0 : i32
    return %arg0, %c0_i32 : i32, i32
  }
  func.func @transform_1(%arg0: i32) -> (i32, i32) {
    %c0_i32 = arith.constant 0 : i32
    %c0_i32_0 = arith.constant 0 : i32
    %c0_i32_1 = arith.constant 0 : i32
    return %c0_i32, %c0_i32_0 : i32, i32
  }
  func.func @transform_2(%arg0: i32) -> (i32, i32) {
    %c0_i32 = arith.constant 0 : i32
    %c0_i32_0 = arith.constant 0 : i32
    %c0_i32_1 = arith.constant 0 : i32
    return %c0_i32, %c0_i32_0 : i32, i32
  }
  func.func @transform_3(%arg0: i32) -> (i32, i32) {
    %c0_i32 = arith.constant 0 : i32
    %c0_i32_0 = arith.constant 0 : i32
    %c0_i32_1 = arith.constant 0 : i32
    return %c0_i32, %c0_i32_0 : i32, i32
  }
  func.func @transform_4(%arg0: i32) -> (i32, i32) {
    %c0_i32 = arith.constant 0 : i32
    %c0_i32_0 = arith.constant 0 : i32
    %c0_i32_1 = arith.constant 0 : i32
    return %c0_i32, %c0_i32_0 : i32, i32
  }
  func.func @transform_5(%arg0: i32) -> (i32, i32) {
    %c0_i32 = arith.constant 0 : i32
    %c0_i32_0 = arith.constant 0 : i32
    %c0_i32_1 = arith.constant 0 : i32
    return %c0_i32, %c0_i32_0 : i32, i32
  }
  func.func @transform_6(%arg0: i32) -> (i32, i32) {
    %c0_i32 = arith.constant 0 : i32
    %c0_i32_0 = arith.constant 0 : i32
    %c0_i32_1 = arith.constant 0 : i32
    return %c0_i32, %c0_i32_0 : i32, i32
  }
  func.func @transform_7(%arg0: i32) -> (i32, i32) {
    %c0_i32 = arith.constant 0 : i32
    %c0_i32_0 = arith.constant 0 : i32
    %c0_i32_1 = arith.constant 0 : i32
    return %c0_i32, %c0_i32_0 : i32, i32
  }
  func.func @transform_8(%arg0: i32) -> (i32, i32) {
    %c0_i32 = arith.constant 0 : i32
    %c0_i32_0 = arith.constant 0 : i32
    %c0_i32_1 = arith.constant 0 : i32
    return %c0_i32, %c0_i32_0 : i32, i32
  }
  func.func @transform_9(%arg0: i32) -> (i32, i32) {
    %c0_i32 = arith.constant 0 : i32
    %c0_i32_0 = arith.constant 0 : i32
    return %arg0, %c0_i32 : i32, i32
  }
}

</mosaic_0001>

<llo_original>
// kernel: embedding_ffnn_forward.1
$region0: #{embedding_ffnn_forward.1}
  #allocation0 [shape = 'u32[]', space=smem, size = 0x4, offset = 0x4, fixed_abs, tag = 'smem constant byte address 0x4 - core index']
  #allocation1 [shape = 'u32[144,128]{1,0:T(1,128)}', space=vmem, size = 0x12000, scoped, tag = 'internal scratch']
  #allocation2 [shape = 'f32[1,1]{1,0:T(1,128)S(1)}', space=vmem, size = 0x200, scoped, tag = 'scoped memory for embedding_ffnn_forward.1']
  %s0 = inlined_call_operand.vmem [shape: bf16[16,128], index: 0, kind: input, shape index: {}]
  %s1 = inlined_call_operand.vmem [shape: bf16[128,128], index: 1, kind: input, shape index: {}]
  %s2 = inlined_call_operand.vmem [shape: f32[1,128], index: 2, kind: input, shape index: {}]
  %s3 = inlined_call_operand.vmem [shape: bf16[128,128], index: 3, kind: input, shape index: {}]
  %s4 = inlined_call_operand.vmem [shape: f32[1,128], index: 4, kind: input, shape index: {}]
  %s5 = inlined_call_operand.vmem [shape: bf16[128,128], index: 5, kind: input, shape index: {}]
  %s6 = inlined_call_operand.vmem [shape: f32[1,128], index: 6, kind: input, shape index: {}]
  %s7 = inlined_call_operand.vmem [shape: f32[1,128], index: 7, kind: input, shape index: {}]
  %s8 = inlined_call_operand.<no memory space> [shape: f32[1,1], index: 8, kind: input, shape index: {}]
  %s9 = inlined_call_operand.vmem [shape: f32[1,16], index: 9, kind: output, shape index: {}]
  %s10 = sld [smem:[#allocation0]]
  $region46: #{embedding_ffnn_forward.1} parent=0
    _
  %s12 = ssub.s32 1, %s10
  %s13 = scalar_select 0, %s12, %s10
  %v14 = vstv %s8
  %15 = vst [vmem:[#allocation2] sm:$0x1] %v14
  // Predicated region
  $region2: #{embedding_ffnn_forward.1} parent=0 // pred_check
    _
  $region3: #{embedding_ffnn_forward.1} parent=0 // pred_check_branch
    %17 = sbr.rel (0) target = $region5
  $region4: #{embedding_ffnn_forward.1} parent=0 // pred_region
    _
  $region5: #{embedding_ffnn_forward.1} parent=0 // pred_fallthru
    _
  // Predicated region
  $region6: #{embedding_ffnn_forward.1} parent=0 // pred_check
    _
  $region7: #{embedding_ffnn_forward.1} parent=0 // pred_check_branch
    %19 = sbr.rel (0) target = $region9
  $region8: #{embedding_ffnn_forward.1} parent=0 // pred_region
    _
  $region9: #{embedding_ffnn_forward.1} parent=0 // pred_fallthru
    _
  // Predicated region
  $region10: #{embedding_ffnn_forward.1} parent=0 // pred_check
    _
  $region11: #{embedding_ffnn_forward.1} parent=0 // pred_check_branch
    %21 = sbr.rel (0) target = $region13
  $region12: #{embedding_ffnn_forward.1} parent=0 // pred_region
    _
  $region13: #{embedding_ffnn_forward.1} parent=0 // pred_fallthru
    _
  // Predicated region
  $region14: #{embedding_ffnn_forward.1} parent=0 // pred_check
    _
  $region15: #{embedding_ffnn_forward.1} parent=0 // pred_check_branch
    %23 = sbr.rel (0) target = $region17
  $region16: #{embedding_ffnn_forward.1} parent=0 // pred_region
    _
  $region17: #{embedding_ffnn_forward.1} parent=0 // pred_fallthru
    _
  // Predicated region
  $region18: #{embedding_ffnn_forward.1} parent=0 // pred_check
    _
  $region19: #{embedding_ffnn_forward.1} parent=0 // pred_check_branch
    %25 = sbr.rel (0) target = $region21
  $region20: #{embedding_ffnn_forward.1} parent=0 // pred_region
    _
  $region21: #{embedding_ffnn_forward.1} parent=0 // pred_fallthru
    _
  // Predicated region
  $region22: #{embedding_ffnn_forward.1} parent=0 // pred_check
    _
  $region23: #{embedding_ffnn_forward.1} parent=0 // pred_check_branch
    %27 = sbr.rel (0) target = $region25
  $region24: #{embedding_ffnn_forward.1} parent=0 // pred_region
    _
  $region25: #{embedding_ffnn_forward.1} parent=0 // pred_fallthru
    _
  // Predicated region
  $region26: #{embedding_ffnn_forward.1} parent=0 // pred_check
    _
  $region27: #{embedding_ffnn_forward.1} parent=0 // pred_check_branch
    %29 = sbr.rel (0) target = $region29
  $region28: #{embedding_ffnn_forward.1} parent=0 // pred_region
    _
  $region29: #{embedding_ffnn_forward.1} parent=0 // pred_fallthru
    _
  // Predicated region
  $region30: #{embedding_ffnn_forward.1} parent=0 // pred_check
    _
  $region31: #{embedding_ffnn_forward.1} parent=0 // pred_check_branch
    %31 = sbr.rel (0) target = $region33
  $region32: #{embedding_ffnn_forward.1} parent=0 // pred_region
    _
  $region33: #{embedding_ffnn_forward.1} parent=0 // pred_fallthru
    _
  // Predicated region
  $region34: #{embedding_ffnn_forward.1} parent=0 // pred_check
    _
  $region35: #{embedding_ffnn_forward.1} parent=0 // pred_check_branch
    %33 = sbr.rel (0) target = $region37
  $region36: #{embedding_ffnn_forward.1} parent=0 // pred_region
    _
  $region37: #{embedding_ffnn_forward.1} parent=0 // pred_fallthru
    _
  %v35 = vld [vmem:[%s0] sm:$0xf]
  %v36 = vld [vmem:[%s0 + $0x4] sm:$0xf]
  %v37 = vld [vmem:[%s1] sm:$0xf]
  %v38 = vld [vmem:[%s1 + $0x4] sm:$0xf]
  %v39 = vld [vmem:[%s1 + $0x8] sm:$0xf]
  %v40 = vld [vmem:[%s1 + $0xc] sm:$0xf]
  %v41 = vld [vmem:[%s1 + $0x10] sm:$0xf]
  %v42 = vld [vmem:[%s1 + $0x14] sm:$0xf]
  %v43 = vld [vmem:[%s1 + $0x18] sm:$0xf]
  %v44 = vld [vmem:[%s1 + $0x1c] sm:$0xf]
  %v45 = vld [vmem:[%s1 + $0x20] sm:$0xf]
  %v46 = vld [vmem:[%s1 + $0x24] sm:$0xf]
  %v47 = vld [vmem:[%s1 + $0x28] sm:$0xf]
  %v48 = vld [vmem:[%s1 + $0x2c] sm:$0xf]
  %v49 = vld [vmem:[%s1 + $0x30] sm:$0xf]
  %v50 = vld [vmem:[%s1 + $0x34] sm:$0xf]
  %v51 = vld [vmem:[%s1 + $0x38] sm:$0xf]
  %v52 = vld [vmem:[%s1 + $0x3c] sm:$0xf]
  %v53 = vld [vmem:[%s2] sm:$0x1]
  %v55 = vlaneseq
  %v56 = vshrl.u32 %v55, 7
  %v57 = vsub.s32 0, %v56
  %v58 = vrot.slane %v53, %v57
  %v62 = vunpack.c.l.b16 %v35
  %v63 = vunpack.c.l.b16 %v36
  %v64 = vpack.c.b16 %v63, %v62
  %v82 = vunpack.c.l.b16 %v37
  %v83 = vunpack.c.l.b16 %v38
  %v84 = vunpack.c.l.b16 %v39
  %v85 = vunpack.c.l.b16 %v40
  %v86 = vunpack.c.l.b16 %v41
  %v87 = vunpack.c.l.b16 %v42
  %v88 = vunpack.c.l.b16 %v43
  %v89 = vunpack.c.l.b16 %v44
  %v90 = vunpack.c.l.b16 %v45
  %v91 = vunpack.c.l.b16 %v46
  %v92 = vunpack.c.l.b16 %v47
  %v93 = vunpack.c.l.b16 %v48
  %v94 = vunpack.c.l.b16 %v49
  %v95 = vunpack.c.l.b16 %v50
  %v96 = vunpack.c.l.b16 %v51
  %v97 = vunpack.c.l.b16 %v52
  %v98 = vpack.c.b16 %v83, %v82
  %v99 = vpack.c.b16 %v85, %v84
  %v100 = vpack.c.b16 %v87, %v86
  %v101 = vpack.c.b16 %v89, %v88
  %v102 = vpack.c.b16 %v91, %v90
  %v103 = vpack.c.b16 %v93, %v92
  %v104 = vpack.c.b16 %v95, %v94
  %v105 = vpack.c.b16 %v97, %v96
  %114 = vmatprep.subr.bf16.mxu0 0
  %115 = vmatpush1.bf16.msra.mxu0 %v105
  %116 = vmatprep.subr.bf16.mxu0 0
  %117 = vmatpush1.bf16.msra.mxu0 %v104
  %118 = vmatprep.subr.bf16.mxu0 0
  %119 = vmatpush1.bf16.msra.mxu0 %v103
  %120 = vmatprep.subr.bf16.mxu0 0
  %121 = vmatpush1.bf16.msra.mxu0 %v102
  %122 = vmatprep.subr.bf16.mxu0 0
  %123 = vmatpush1.bf16.msra.mxu0 %v101
  %124 = vmatprep.subr.bf16.mxu0 0
  %125 = vmatpush1.bf16.msra.mxu0 %v100
  %126 = vmatprep.subr.bf16.mxu0 0
  %127 = vmatpush1.bf16.msra.mxu0 %v99
  %128 = vmatprep.subr.bf16.mxu0 0
  %129 = vmatpush1.bf16.msra.mxu0 %v98
  %130 = vmatprep.subr.bf16.mxu0 0
  %131 = vmatpush2.bf16.msra.mxu0 0
  %132 = vmatprep.subr.bf16.mxu0 0
  %133 = vmatpush2.bf16.msra.mxu0 0
  %134 = vmatprep.subr.bf16.mxu0 0
  %135 = vmatpush2.bf16.msra.mxu0 0
  %136 = vmatprep.subr.bf16.mxu0 0
  %137 = vmatpush2.bf16.msra.mxu0 0
  %138 = vmatprep.subr.bf16.mxu0 0
  %139 = vmatpush2.bf16.msra.mxu0 0
  %140 = vmatprep.subr.bf16.mxu0 0
  %141 = vmatpush2.bf16.msra.mxu0 0
  %142 = vmatprep.subr.bf16.mxu0 0
  %143 = vmatpush2.bf16.msra.mxu0 0
  %144 = vmatprep.subr.bf16.mxu0 0
  %145 = vmatpush2.bf16.msra.mxu0 0
  %146 = vmatprep.mubr.bf16.mxu0 0
  %147 = vmatmul.mubr.bf16.gmra.mxu0 %v64
  %v148 = vpop.f32.mrf.mxu0
  %v149 = vadd.f32 %v58, %v148
  %v150 = vpop.f32.mrf.mxu0
  %v151 = vpop.f32.mrf.mxu0
  %v152 = vadd.f32 %v58, %v151
  %v153 = vpop.f32.mrf.mxu0
  %154 = vdwg.mxu0
  %v155 = vmax.f32 %v149, 0.0
  %v156 = vmax.f32 %v152, 0.0
  %v157 = vpack.c.bf16 %v156, %v155
  %v158 = vld [vmem:[%s3] sm:$0xf]
  %v159 = vld [vmem:[%s3 + $0x4] sm:$0xf]
  %v160 = vld [vmem:[%s3 + $0x8] sm:$0xf]
  %v161 = vld [vmem:[%s3 + $0xc] sm:$0xf]
  %v162 = vld [vmem:[%s3 + $0x10] sm:$0xf]
  %v163 = vld [vmem:[%s3 + $0x14] sm:$0xf]
  %v164 = vld [vmem:[%s3 + $0x18] sm:$0xf]
  %v165 = vld [vmem:[%s3 + $0x1c] sm:$0xf]
  %v166 = vld [vmem:[%s3 + $0x20] sm:$0xf]
  %v167 = vld [vmem:[%s3 + $0x24] sm:$0xf]
  %v168 = vld [vmem:[%s3 + $0x28] sm:$0xf]
  %v169 = vld [vmem:[%s3 + $0x2c] sm:$0xf]
  %v170 = vld [vmem:[%s3 + $0x30] sm:$0xf]
  %v171 = vld [vmem:[%s3 + $0x34] sm:$0xf]
  %v172 = vld [vmem:[%s3 + $0x38] sm:$0xf]
  %v173 = vld [vmem:[%s3 + $0x3c] sm:$0xf]
  %v174 = vld [vmem:[%s4] sm:$0x1]
  %v176 = vlaneseq
  %v177 = vshrl.u32 %v176, 7
  %v178 = vsub.s32 0, %v177
  %v179 = vrot.slane %v174, %v178
  %v197 = vunpack.c.l.b16 %v158
  %v198 = vunpack.c.l.b16 %v159
  %v199 = vunpack.c.l.b16 %v160
  %v200 = vunpack.c.l.b16 %v161
  %v201 = vunpack.c.l.b16 %v162
  %v202 = vunpack.c.l.b16 %v163
  %v203 = vunpack.c.l.b16 %v164
  %v204 = vunpack.c.l.b16 %v165
  %v205 = vunpack.c.l.b16 %v166
  %v206 = vunpack.c.l.b16 %v167
  %v207 = vunpack.c.l.b16 %v168
  %v208 = vunpack.c.l.b16 %v169
  %v209 = vunpack.c.l.b16 %v170
  %v210 = vunpack.c.l.b16 %v171
  %v211 = vunpack.c.l.b16 %v172
  %v212 = vunpack.c.l.b16 %v173
  %v213 = vpack.c.b16 %v198, %v197
  %v214 = vpack.c.b16 %v200, %v199
  %v215 = vpack.c.b16 %v202, %v201
  %v216 = vpack.c.b16 %v204, %v203
  %v217 = vpack.c.b16 %v206, %v205
  %v218 = vpack.c.b16 %v208, %v207
  %v219 = vpack.c.b16 %v210, %v209
  %v220 = vpack.c.b16 %v212, %v211
  %229 = vmatprep.subr.bf16.mxu0 0
  %230 = vmatpush1.bf16.msra.mxu0 %v220
  %231 = vmatprep.subr.bf16.mxu0 0
  %232 = vmatpush1.bf16.msra.mxu0 %v219
  %233 = vmatprep.subr.bf16.mxu0 0
  %234 = vmatpush1.bf16.msra.mxu0 %v218
  %235 = vmatprep.subr.bf16.mxu0 0
  %236 = vmatpush1.bf16.msra.mxu0 %v217
  %237 = vmatprep.subr.bf16.mxu0 0
  %238 = vmatpush1.bf16.msra.mxu0 %v216
  %239 = vmatprep.subr.bf16.mxu0 0
  %240 = vmatpush1.bf16.msra.mxu0 %v215
  %241 = vmatprep.subr.bf16.mxu0 0
  %242 = vmatpush1.bf16.msra.mxu0 %v214
  %243 = vmatprep.subr.bf16.mxu0 0
  %244 = vmatpush1.bf16.msra.mxu0 %v213
  %245 = vmatprep.subr.bf16.mxu0 0
  %246 = vmatpush2.bf16.msra.mxu0 0
  %247 = vmatprep.subr.bf16.mxu0 0
  %248 = vmatpush2.bf16.msra.mxu0 0
  %249 = vmatprep.subr.bf16.mxu0 0
  %250 = vmatpush2.bf16.msra.mxu0 0
  %251 = vmatprep.subr.bf16.mxu0 0
  %252 = vmatpush2.bf16.msra.mxu0 0
  %253 = vmatprep.subr.bf16.mxu0 0
  %254 = vmatpush2.bf16.msra.mxu0 0
  %255 = vmatprep.subr.bf16.mxu0 0
  %256 = vmatpush2.bf16.msra.mxu0 0
  %257 = vmatprep.subr.bf16.mxu0 0
  %258 = vmatpush2.bf16.msra.mxu0 0
  %259 = vmatprep.subr.bf16.mxu0 0
  %260 = vmatpush2.bf16.msra.mxu0 0
  %261 = vmatprep.mubr.bf16.mxu0 0
  %262 = vmatmul.mubr.bf16.gmra.mxu0 %v157
  %v263 = vpop.f32.mrf.mxu0
  %v264 = vadd.f32 %v179, %v263
  %v265 = vpop.f32.mrf.mxu0
  %v266 = vpop.f32.mrf.mxu0
  %v267 = vadd.f32 %v179, %v266
  %v268 = vpop.f32.mrf.mxu0
  %269 = vdwg.mxu0
  %v270 = vmax.f32 %v264, 0.0
  %v271 = vmax.f32 %v267, 0.0
  %v272 = vpack.c.bf16 %v271, %v270
  %v273 = vld [vmem:[%s5] sm:$0xf]
  %v274 = vld [vmem:[%s5 + $0x4] sm:$0xf]
  %v275 = vld [vmem:[%s5 + $0x8] sm:$0xf]
  %v276 = vld [vmem:[%s5 + $0xc] sm:$0xf]
  %v277 = vld [vmem:[%s5 + $0x10] sm:$0xf]
  %v278 = vld [vmem:[%s5 + $0x14] sm:$0xf]
  %v279 = vld [vmem:[%s5 + $0x18] sm:$0xf]
  %v280 = vld [vmem:[%s5 + $0x1c] sm:$0xf]
  %v281 = vld [vmem:[%s5 + $0x20] sm:$0xf]
  %v282 = vld [vmem:[%s5 + $0x24] sm:$0xf]
  %v283 = vld [vmem:[%s5 + $0x28] sm:$0xf]
  %v284 = vld [vmem:[%s5 + $0x2c] sm:$0xf]
  %v285 = vld [vmem:[%s5 + $0x30] sm:$0xf]
  %v286 = vld [vmem:[%s5 + $0x34] sm:$0xf]
  %v287 = vld [vmem:[%s5 + $0x38] sm:$0xf]
  %v288 = vld [vmem:[%s5 + $0x3c] sm:$0xf]
  %v289 = vld [vmem:[%s6] sm:$0x1]
  %v291 = vlaneseq
  %v292 = vshrl.u32 %v291, 7
  %v293 = vsub.s32 0, %v292
  %v294 = vrot.slane %v289, %v293
  %v312 = vunpack.c.l.b16 %v273
  %v313 = vunpack.c.l.b16 %v274
  %v314 = vunpack.c.l.b16 %v275
  %v315 = vunpack.c.l.b16 %v276
  %v316 = vunpack.c.l.b16 %v277
  %v317 = vunpack.c.l.b16 %v278
  %v318 = vunpack.c.l.b16 %v279
  %v319 = vunpack.c.l.b16 %v280
  %v320 = vunpack.c.l.b16 %v281
  %v321 = vunpack.c.l.b16 %v282
  %v322 = vunpack.c.l.b16 %v283
  %v323 = vunpack.c.l.b16 %v284
  %v324 = vunpack.c.l.b16 %v285
  %v325 = vunpack.c.l.b16 %v286
  %v326 = vunpack.c.l.b16 %v287
  %v327 = vunpack.c.l.b16 %v288
  %v328 = vpack.c.b16 %v313, %v312
  %v329 = vpack.c.b16 %v315, %v314
  %v330 = vpack.c.b16 %v317, %v316
  %v331 = vpack.c.b16 %v319, %v318
  %v332 = vpack.c.b16 %v321, %v320
  %v333 = vpack.c.b16 %v323, %v322
  %v334 = vpack.c.b16 %v325, %v324
  %v335 = vpack.c.b16 %v327, %v326
  %344 = vmatprep.subr.bf16.mxu0 0
  %345 = vmatpush1.bf16.msra.mxu0 %v335
  %346 = vmatprep.subr.bf16.mxu0 0
  %347 = vmatpush1.bf16.msra.mxu0 %v334
  %348 = vmatprep.subr.bf16.mxu0 0
  %349 = vmatpush1.bf16.msra.mxu0 %v333
  %350 = vmatprep.subr.bf16.mxu0 0
  %351 = vmatpush1.bf16.msra.mxu0 %v332
  %352 = vmatprep.subr.bf16.mxu0 0
  %353 = vmatpush1.bf16.msra.mxu0 %v331
  %354 = vmatprep.subr.bf16.mxu0 0
  %355 = vmatpush1.bf16.msra.mxu0 %v330
  %356 = vmatprep.subr.bf16.mxu0 0
  %357 = vmatpush1.bf16.msra.mxu0 %v329
  %358 = vmatprep.subr.bf16.mxu0 0
  %359 = vmatpush1.bf16.msra.mxu0 %v328
  %360 = vmatprep.subr.bf16.mxu0 0
  %361 = vmatpush2.bf16.msra.mxu0 0
  %362 = vmatprep.subr.bf16.mxu0 0
  %363 = vmatpush2.bf16.msra.mxu0 0
  %364 = vmatprep.subr.bf16.mxu0 0
  %365 = vmatpush2.bf16.msra.mxu0 0
  %366 = vmatprep.subr.bf16.mxu0 0
  %367 = vmatpush2.bf16.msra.mxu0 0
  %368 = vmatprep.subr.bf16.mxu0 0
  %369 = vmatpush2.bf16.msra.mxu0 0
  %370 = vmatprep.subr.bf16.mxu0 0
  %371 = vmatpush2.bf16.msra.mxu0 0
  %372 = vmatprep.subr.bf16.mxu0 0
  %373 = vmatpush2.bf16.msra.mxu0 0
  %374 = vmatprep.subr.bf16.mxu0 0
  %375 = vmatpush2.bf16.msra.mxu0 0
  %376 = vmatprep.mubr.bf16.mxu0 0
  %377 = vmatmul.mubr.bf16.gmra.mxu0 %v272
  %v378 = vpop.f32.mrf.mxu0
  %v379 = vadd.f32 %v294, %v378
  %v380 = vpop.f32.mrf.mxu0
  %v381 = vpop.f32.mrf.mxu0
  %v382 = vadd.f32 %v294, %v381
  %v383 = vpop.f32.mrf.mxu0
  %384 = vdwg.mxu0
  %v385 = vmax.f32 %v379, 0.0
  %v386 = vmax.f32 %v382, 0.0
  %v387 = vld [vmem:[%s7] sm:$0x1]
  %v389 = vlaneseq
  %v390 = vshrl.u32 %v389, 7
  %v391 = vsub.s32 0, %v390
  %v392 = vrot.slane %v387, %v391
  %v394 = vmul.f32 %v385, %v392
  %v395 = vmul.f32 %v386, %v392
  %396 = vadd.xlane.f32.xlu0 %v394
  %v397 = vpop.xlane.xlu0 %396
  %398 = vadd.xlane.f32.xlu0 %v395
  %v399 = vpop.xlane.xlu0 %398
  %v400 = vld [vmem:[#allocation2] sm:$0x1]
  %v402 = vlaneseq
  %v403 = vshrl.u32 %v402, 7
  %v404 = vsub.s32 0, %v403
  %v405 = vrot.slane %v400, %v404
  %v407 = vadd.f32 %v397, %v405
  %v408 = vadd.f32 %v399, %v405
  %409 = vxpose.xlu0.b32.start [1/16] %v407, 128
  %410 = vxpose.xlu0.b32.cont [2/16] %v408, 128
  %411 = vxpose.xlu0.b32.cont [3/16] 0.0, 128
  %412 = vxpose.xlu0.b32.cont [4/16] 0.0, 128
  %413 = vxpose.xlu0.b32.cont [5/16] 0.0, 128
  %414 = vxpose.xlu0.b32.cont [6/16] 0.0, 128
  %415 = vxpose.xlu0.b32.cont [7/16] 0.0, 128
  %416 = vxpose.xlu0.b32.cont [8/16] 0.0, 128
  %417 = vxpose.xlu0.b32.cont [9/16] 0.0, 128
  %418 = vxpose.xlu0.b32.cont [10/16] 0.0, 128
  %419 = vxpose.xlu0.b32.cont [11/16] 0.0, 128
  %420 = vxpose.xlu0.b32.cont [12/16] 0.0, 128
  %421 = vxpose.xlu0.b32.cont [13/16] 0.0, 128
  %422 = vxpose.xlu0.b32.cont [14/16] 0.0, 128
  %423 = vxpose.xlu0.b32.cont [15/16] 0.0, 128
  %424 = vxpose.xlu0.b32.end [16/16] 0.0, 128
  %v425 = vpop.trf.xlu0
  %v426 = vpop.trf.xlu0
  %v427 = vpop.trf.xlu0
  %v428 = vpop.trf.xlu0
  %v429 = vpop.trf.xlu0
  %v430 = vpop.trf.xlu0
  %v431 = vpop.trf.xlu0
  %v432 = vpop.trf.xlu0
  %v433 = vpop.trf.xlu0
  %v434 = vpop.trf.xlu0
  %v435 = vpop.trf.xlu0
  %v436 = vpop.trf.xlu0
  %v437 = vpop.trf.xlu0
  %v438 = vpop.trf.xlu0
  %v439 = vpop.trf.xlu0
  %v440 = vpop.trf.xlu0
  %v441 = vxor.u32 %v425, 2147483648
  %v442 = vmul.f32 %v441, 1.442695
  %v443 = vpow.pop %v442
  %v444 = vadd.f32 %v443, 1.0
  %v445 = vrcp.pop %v444
  %v446 = vmul.f32 1.0, %v445
  %vm447 = vcmask 122880
  %448 = vst.msk [vmem:[%s9] sm:$0x1] %vm447, %v446
  // Predicated region
  $region38: #{embedding_ffnn_forward.1} parent=0 // pred_check
    _
  $region39: #{embedding_ffnn_forward.1} parent=0 // pred_check_branch
    %450 = sbr.rel (0) target = $region41
  $region40: #{embedding_ffnn_forward.1} parent=0 // pred_region
    _
  $region41: #{embedding_ffnn_forward.1} parent=0 // pred_fallthru
    _
  // Predicated region
  $region42: #{embedding_ffnn_forward.1} parent=0 // pred_check
    _
  $region43: #{embedding_ffnn_forward.1} parent=0 // pred_check_branch
    %452 = sbr.rel (0) target = $region45
  $region44: #{embedding_ffnn_forward.1} parent=0 // pred_region
    _
  $region45: #{embedding_ffnn_forward.1} parent=0 // pred_fallthru
    _

</llo_original>
